<compile_context>
chip_gen: v6e
topology: v6e:2x2x1
jax: 0.10.0
libtpu: 0.0.40
codegen_flags: <defaults>
</compile_context>

<pallas_src>
import functools

import numpy as np
import jax
import jax.numpy as jnp
from jax.experimental import pallas as pl
from jax.experimental.pallas import tpu as pltpu

BLK = 8          # BM3D transform block size
HARD_LAMBDA = 2.7


# ----------------------------------------------------------------------------
# host-side constants / helpers
# ----------------------------------------------------------------------------
def _round_up(x, m):
    return ((x + m - 1) // m) * m


def _dct8_np():
    n = BLK
    k = np.arange(n, dtype=np.float64)[:, None]
    i = np.arange(n, dtype=np.float64)[None, :]
    d = np.cos(np.pi * (2.0 * i + 1.0) * k / (2.0 * n)) * np.sqrt(2.0 / n)
    d[0, :] = 1.0 / np.sqrt(n)
    return d.astype(np.float32)


def _block_diag_dct_np(n):
    """(n, n) block-diagonal matrix with the 8x8 DCT-II basis on the diagonal."""
    assert n % BLK == 0
    d = _dct8_np()
    m = np.zeros((n, n), dtype=np.float32)
    for b in range(n // BLK):
        m[b * BLK:(b + 1) * BLK, b * BLK:(b + 1) * BLK] = d
    return m


def _lane_op_cap():
    """Lane-side DCT operator width: 128 on v5e and earlier, 256 on v6e/v7x."""
    try:
        kind = jax.devices()[0].device_kind.lower()
    except Exception:
        return 256
    for old in ("v2", "v3", "v4", "v5"):
        if old in kind:
            return 128
    return 256


def _pick_sublane_op(m, sub_mult):
    """Sublane-side operator size tr and padded sublane extent.

    tr is capped at 128 (never grown with the data tile — the block-diagonal
    matmul wastes tr/8 MXU MACs per element).  Prefers an exact divisor of m;
    otherwise pads m up to a multiple of 128.
    """
    cap = 128
    if m <= cap:
        return m, m                       # full extent (exempt from (8,128) rule)
    t = cap - (cap % sub_mult)
    while t >= 64:
        if t % sub_mult == 0 and m % t == 0:
            return t, m
        t -= sub_mult
    return cap, _round_up(m, cap)


def _pick_lane_op(n, cap):
    """Lane-side operator size tc (128 or 256) and padded lane extent.

    The lane extent is always padded up to a multiple of 128 so output stores
    stay lane-dense and the operator never falls back to an (N, N) matrix.
    """
    n128 = _round_up(n, 128)
    if n128 >= cap and n128 % cap == 0:
        return cap, n128
    return 128, n128


def _choose_slabs(m_blocks, n_blocks, tr_op, tc_op, itemsize):
    """How many operator-sized slabs to pack into one DMA'd data tile."""
    target_bytes = 2 << 20          # ~2 MiB data tile
    max_slabs = 16                  # bound the unrolled kernel body
    slab_bytes = tr_op * tc_op * max(itemsize, 4)
    total_blocks = m_blocks * n_blocks

    def ok(r, c):
        if m_blocks % r or n_blocks % c:
            return False
        if r * c > max_slabs or r * c * slab_bytes > target_bytes:
            return False
        # keep >= 2 grid steps whenever possible so both v7x TensorCores get work
        if (m_blocks // r) * (n_blocks // c) < min(2, total_blocks):
            return False
        return True

    best = (1, 1)
    for r in range(1, min(m_blocks, max_slabs) + 1):
        for c in range(1, min(n_blocks, max_slabs) + 1):
            if ok(r, c):
                # prefer more slabs; tie-break towards wider (lane) slabs
                if (r * c, c) > (best[0] * best[1], best[1]):
                    best = (r, c)
    return best


def _vmem_limit_bytes(tr_data, tc_data, tr_op, tc_op, itemsize):
    need = 2 * 2 * tr_data * tc_data * itemsize            # in + out, double-buffered
    need += 2 * 2 * (tr_op * tr_op + tc_op * tc_op) * 2    # bf16 DCT constants
    need += 10 * tr_op * tc_op * 4                         # per-slab f32 temporaries
    return int(min(max(2 * need, 16 << 20), 48 << 20))


# ----------------------------------------------------------------------------
# kernel: one (tr_data, tc_data) data tile per grid step, looping over
# operator-sized (tr_op, tc_op) slabs internally
# ----------------------------------------------------------------------------
def _bm3d_slab_kernel(sigma_ref, x_ref, dr_ref, drt_ref, dc_ref, dct_ref, o_ref,
                      *, tr_op, tc_op, n_r, n_c):
    """Blockwise 8x8 DCT -> hard threshold (DC kept) -> inverse DCT.

    Per slab:  Y = Dr @ X @ Dc^T      (bf16 MXU matmuls, f32 accumulation)
               Y <- where(|Y| >= 2.7*sigma or DC, Y, 0)       (f32)
               X_hat = Dr^T @ Y @ Dc
    """
    thr = jnp.float32(HARD_LAMBDA) * sigma_ref[0, 0]

    # DC-coefficient keep-mask for one (tr_op, tc_op) slab, built in-kernel
    # (cheap VPU integer ops; saves an input stream + its VMEM buffers).
    row = jax.lax.broadcasted_iota(jnp.int32, (tr_op, tc_op), 0)
    col = jax.lax.broadcasted_iota(jnp.int32, (tr_op, tc_op), 1)
    dc_keep = jnp.logical_and((row % BLK) == 0, (col % BLK) == 0)

    dr = dr_ref[...]
    drt = drt_ref[...]
    dc = dc_ref[...]
    dct = dct_ref[...]

    for i in range(n_r):
        rs = slice(i * tr_op, (i + 1) * tr_op)
        for j in range(n_c):
            cs = slice(j * tc_op, (j + 1) * tc_op)
            xb = x_ref[rs, cs].astype(jnp.bfloat16)

            # forward blockwise DCT
            t = jnp.dot(dr, xb, preferred_element_type=jnp.float32)
            y = jnp.dot(t.astype(jnp.bfloat16), dct,
                        preferred_element_type=jnp.float32)

            # hard threshold in f32, always keep each 8x8 block's DC coefficient
            keep = jnp.logical_or(jnp.abs(y) >= thr, dc_keep)
            y = jnp.where(keep, y, jnp.float32(0.0))

            # inverse blockwise DCT
            w = jnp.dot(y.astype(jnp.bfloat16), dc,
                        preferred_element_type=jnp.float32)
            z = jnp.dot(drt, w.astype(jnp.bfloat16),
                        preferred_element_type=jnp.float32)

            o_ref[rs, cs] = z.astype(o_ref.dtype)


# ----------------------------------------------------------------------------
# wrapper: Pallas equivalent of BM3D.forward(x, sigma)
# ----------------------------------------------------------------------------
def bm3d_denoise(x, sigma):
    """:param x: (B, C, H, W) noisy images (H, W multiples of 8)
    :param sigma: scalar noise level
    :returns: (B, C, H, W) filtered images, same dtype as x
    """
    B, C, H, W = x.shape
    assert H % BLK == 0 and W % BLK == 0, "H, W must be multiples of 8"

    # The 8x8 block DCT only mixes within 8-element groups, so planes can be
    # stacked along either axis exactly.  Pick the layout that keeps the lane
    # (last) dimension large.
    if W >= 128:
        x2d = x.reshape(B * C * H, W)                  # rows = (plane, h)
        layout_cols = False
    else:
        x2d = jnp.transpose(x.reshape(B * C, H, W), (1, 0, 2)).reshape(H, B * C * W)
        layout_cols = True                             # cols = (plane, w)
    M, N = x2d.shape
    itemsize = x.dtype.itemsize

    # sublane tiling granularity is dtype-dependent (packed dtypes)
    sub_mult = BLK * max(1, 4 // max(itemsize, 1))     # 8 f32, 16 bf16, 32 int8

    tr_op, m_pad = _pick_sublane_op(M, sub_mult)
    tc_op, n_pad = _pick_lane_op(N, _lane_op_cap())

    # zero-padding is exact: pad rows/cols form whole 8-groups (M, N are
    # multiples of 8), never mix with real data, and are sliced off below.
    if (m_pad, n_pad) != (M, N):
        x2d = jnp.pad(x2d, ((0, m_pad - M), (0, n_pad - N)))

    m_blocks, n_blocks = m_pad // tr_op, n_pad // tc_op
    n_r, n_c = _choose_slabs(m_blocks, n_blocks, tr_op, tc_op, itemsize)
    tr_data, tc_data = n_r * tr_op, n_c * tc_op
    grid = (m_pad // tr_data, n_pad // tc_data)

    # fixed small block-diagonal DCT matrices (pre-transposed copies included)
    dr_np = _block_diag_dct_np(tr_op)
    dc_np = _block_diag_dct_np(tc_op)
    dr = jnp.asarray(dr_np, dtype=jnp.bfloat16)
    drt = jnp.asarray(dr_np.T, dtype=jnp.bfloat16)
    dc = jnp.asarray(dc_np, dtype=jnp.bfloat16)
    dct = jnp.asarray(dc_np.T, dtype=jnp.bfloat16)

    sigma_arr = jnp.asarray(sigma, dtype=jnp.float32).reshape(1, 1)

    vmem_limit = _vmem_limit_bytes(tr_data, tc_data, tr_op, tc_op, itemsize)
    cost = pl.CostEstimate(
        flops=int(4 * (tr_op + tc_op) * m_pad * n_pad),   # bloated (block-diag) MXU count
        transcendentals=0,
        bytes_accessed=int(2 * m_pad * n_pad * itemsize),
    )

    kernel = functools.partial(_bm3d_slab_kernel, tr_op=tr_op, tc_op=tc_op,
                               n_r=n_r, n_c=n_c)

    out2d = pl.pallas_call(
        kernel,
        out_shape=jax.ShapeDtypeStruct((m_pad, n_pad), x.dtype),
        grid=grid,
        in_specs=[
            # sigma: (1,1) scalar resident in SMEM
            pl.BlockSpec(memory_space=pltpu.MemorySpace.SMEM),
            # data tile (several operator-sized slabs per grid step)
            pl.BlockSpec((tr_data, tc_data), lambda i, j: (i, j)),
            # grid-invariant block-diagonal DCT operators (same block every step)
            pl.BlockSpec((tr_op, tr_op), lambda i, j: (0, 0)),
            pl.BlockSpec((tr_op, tr_op), lambda i, j: (0, 0)),
            pl.BlockSpec((tc_op, tc_op), lambda i, j: (0, 0)),
            pl.BlockSpec((tc_op, tc_op), lambda i, j: (0, 0)),
        ],
        out_specs=pl.BlockSpec((tr_data, tc_data), lambda i, j: (i, j)),
        compiler_params=pltpu.CompilerParams(
            dimension_semantics=("parallel", "parallel"),
            vmem_limit_bytes=vmem_limit,
        ),
        cost_estimate=cost,
    )(sigma_arr, x2d, dr, drt, dc, dct)

    out2d = out2d[:M, :N]
    if layout_cols:
        out = jnp.transpose(out2d.reshape(H, B * C, W), (1, 0, 2)).reshape(B, C, H, W)
    else:
        out = out2d.reshape(B, C, H, W)
    return out


# ----------------------------------------------------------------------------
# pure-JAX f32 reference of the same blockwise DCT hard-threshold filter
# ----------------------------------------------------------------------------
def _reference(x, sigma):
    B, C, H, W = x.shape
    d = jnp.asarray(_dct8_np())
    xb = x.astype(jnp.float32).reshape(B, C, H // BLK, BLK, W // BLK, BLK)
    y = jnp.einsum("ij,bchjwk->bchiwk", d, xb)
    y = jnp.einsum("bchiwk,lk->bchiwl", y, d)
    thr = jnp.float32(HARD_LAMBDA * sigma)
    is_dc = (jnp.arange(BLK) == 0)[:, None, None] & (jnp.arange(BLK) == 0)[None, None, :]
    keep = jnp.logical_or(jnp.abs(y) >= thr, is_dc)
    y = jnp.where(keep, y, 0.0)
    z = jnp.einsum("ij,bchiwl->bchjwl", d, y)
    z = jnp.einsum("bchjwl,lk->bchjwk", z, d)
    return z.reshape(B, C, H, W)


if __name__ == "__main__":
    key = jax.random.PRNGKey(0)

    # --- small-image path (column layout, single tile) ---
    k_img, k_noise, key = jax.random.split(key, 3)
    B, C, H, W = 2, 4, 16, 16
    clean = jax.random.uniform(k_img, (B, C, H, W), dtype=jnp.float32)
    sigma = 0.1
    noisy = clean + sigma * jax.random.normal(k_noise, (B, C, H, W), dtype=jnp.float32)

    out = bm3d_denoise(noisy, sigma)
    out = jax.block_until_ready(out)
    assert out.shape == noisy.shape and out.dtype == noisy.dtype
    assert bool(jnp.all(jnp.isfinite(out)))
    ref = _reference(noisy, sigma)
    mae = float(jnp.mean(jnp.abs(out - ref)))
    assert mae < 0.05, f"mean abs error vs f32 reference too large (small): {mae}"

    # --- larger-image path (row layout, multi-slab tiles, >=2 grid steps) ---
    k_img2, k_noise2, key = jax.random.split(key, 3)
    B2, C2, H2, W2 = 2, 3, 128, 256
    clean2 = jax.random.uniform(k_img2, (B2, C2, H2, W2), dtype=jnp.float32)
    noisy2 = clean2 + sigma * jax.random.normal(k_noise2, (B2, C2, H2, W2),
                                                dtype=jnp.float32)
    out2 = bm3d_denoise(noisy2, sigma)
    out2 = jax.block_until_ready(out2)
    assert out2.shape == noisy2.shape and out2.dtype == noisy2.dtype
    assert bool(jnp.all(jnp.isfinite(out2)))
    ref2 = _reference(noisy2, sigma)
    mae2 = float(jnp.mean(jnp.abs(out2 - ref2)))
    assert mae2 < 0.05, f"mean abs error vs f32 reference too large (large): {mae2}"

    print("KERNEL_OK")
</pallas_src>

<mosaic_0001>
module attributes {stable_mosaic.version = 11 : i64} {
  func.func @_bm3d_slab_kernel(%arg0: i32, %arg1: i32, %arg2: memref<1x1xf32, #tpu.memory_space<smem>>, %arg3: memref<16x128xf32, #tpu.memory_space<vmem>>, %arg4: memref<16x16xbf16, #tpu.memory_space<vmem>>, %arg5: memref<16x16xbf16, #tpu.memory_space<vmem>>, %arg6: memref<128x128xbf16, #tpu.memory_space<vmem>>, %arg7: memref<128x128xbf16, #tpu.memory_space<vmem>>, %arg8: memref<16x128xf32, #tpu.memory_space<vmem>>) attributes {dimension_semantics = [#tpu.dimension_semantics<parallel>, #tpu.dimension_semantics<parallel>], iteration_bounds = array<i64: 1, 1>, scalar_prefetch = 0 : i64, scratch_operands = 0 : i64, tpu.core_type = #tpu.core_type<tc>, window_params = [{transform_indices = @transform_0, window_bounds = array<i64: 1, 1>}, {transform_indices = @transform_1, window_bounds = array<i64: 16, 128>}, {pipeline_mode = #tpu.pipeline_mode<synchronous>, transform_indices = @transform_2, window_bounds = array<i64: 16, 16>}, {pipeline_mode = #tpu.pipeline_mode<synchronous>, transform_indices = @transform_3, window_bounds = array<i64: 16, 16>}, {pipeline_mode = #tpu.pipeline_mode<synchronous>, transform_indices = @transform_4, window_bounds = array<i64: 128, 128>}, {pipeline_mode = #tpu.pipeline_mode<synchronous>, transform_indices = @transform_5, window_bounds = array<i64: 128, 128>}, {transform_indices = @transform_6, window_bounds = array<i64: 16, 128>}]} {
    %c0 = arith.constant 0 : index
    %c0_0 = arith.constant 0 : index
    %0 = memref.load %arg2[%c0, %c0_0] : memref<1x1xf32, #tpu.memory_space<smem>>
    %cst = arith.constant 2.700000e+00 : f32
    %1 = arith.mulf %cst, %0 : f32
    %2 = tpu.iota {dimensions = array<i32: 0>} : vector<16x128xi32>
    %3 = tpu.iota {dimensions = array<i32: 1>} : vector<16x128xi32>
    %c8_i32 = arith.constant 8 : i32
    %c0_i32 = arith.constant 0 : i32
    %4 = arith.cmpi eq, %c8_i32, %c0_i32 : i32
    %c1_i32 = arith.constant 1 : i32
    %5 = arith.select %4, %c1_i32, %c8_i32 : i32
    %6 = vector.broadcast %5 : i32 to vector<16x128xi32>
    %7 = arith.remsi %2, %6 : vector<16x128xi32>
    %c0_i32_1 = arith.constant 0 : i32
    %8 = vector.broadcast %c0_i32_1 : i32 to vector<16x128xi32>
    %9 = arith.cmpi ne, %7, %8 : vector<16x128xi32>
    %c0_i32_2 = arith.constant 0 : i32
    %10 = vector.broadcast %c0_i32_2 : i32 to vector<16x128xi32>
    %11 = arith.cmpi slt, %7, %10 : vector<16x128xi32>
    %c0_i32_3 = arith.constant 0 : i32
    %12 = arith.cmpi slt, %5, %c0_i32_3 : i32
    %13 = vector.broadcast %12 : i1 to vector<16x128xi1>
    %14 = vector.broadcast %13 : vector<16x128xi1> to vector<16x128xi1>
    %15 = arith.xori %11, %14 : vector<16x128xi1>
    %16 = arith.andi %15, %9 : vector<16x128xi1>
    %17 = vector.broadcast %5 : i32 to vector<16x128xi32>
    %18 = arith.addi %7, %17 : vector<16x128xi32>
    %19 = arith.select %16, %18, %7 : vector<16x128xi1>, vector<16x128xi32>
    %c0_i32_4 = arith.constant 0 : i32
    %20 = vector.broadcast %c0_i32_4 : i32 to vector<16x128xi32>
    %21 = arith.cmpi eq, %19, %20 : vector<16x128xi32>
    %c8_i32_5 = arith.constant 8 : i32
    %c0_i32_6 = arith.constant 0 : i32
    %22 = arith.cmpi eq, %c8_i32_5, %c0_i32_6 : i32
    %c1_i32_7 = arith.constant 1 : i32
    %23 = arith.select %22, %c1_i32_7, %c8_i32_5 : i32
    %24 = vector.broadcast %23 : i32 to vector<16x128xi32>
    %25 = arith.remsi %3, %24 : vector<16x128xi32>
    %c0_i32_8 = arith.constant 0 : i32
    %26 = vector.broadcast %c0_i32_8 : i32 to vector<16x128xi32>
    %27 = arith.cmpi ne, %25, %26 : vector<16x128xi32>
    %c0_i32_9 = arith.constant 0 : i32
    %28 = vector.broadcast %c0_i32_9 : i32 to vector<16x128xi32>
    %29 = arith.cmpi slt, %25, %28 : vector<16x128xi32>
    %c0_i32_10 = arith.constant 0 : i32
    %30 = arith.cmpi slt, %23, %c0_i32_10 : i32
    %31 = vector.broadcast %30 : i1 to vector<16x128xi1>
    %32 = vector.broadcast %31 : vector<16x128xi1> to vector<16x128xi1>
    %33 = arith.xori %29, %32 : vector<16x128xi1>
    %34 = arith.andi %33, %27 : vector<16x128xi1>
    %35 = vector.broadcast %23 : i32 to vector<16x128xi32>
    %36 = arith.addi %25, %35 : vector<16x128xi32>
    %37 = arith.select %34, %36, %25 : vector<16x128xi1>, vector<16x128xi32>
    %c0_i32_11 = arith.constant 0 : i32
    %38 = vector.broadcast %c0_i32_11 : i32 to vector<16x128xi32>
    %39 = arith.cmpi eq, %37, %38 : vector<16x128xi32>
    %40 = arith.andi %21, %39 : vector<16x128xi1>
    %c0_12 = arith.constant 0 : index
    %c0_13 = arith.constant 0 : index
    %41 = vector.load %arg4[%c0_12, %c0_13] : memref<16x16xbf16, #tpu.memory_space<vmem>>, vector<16x16xbf16>
    %c0_14 = arith.constant 0 : index
    %c0_15 = arith.constant 0 : index
    %42 = vector.load %arg5[%c0_14, %c0_15] : memref<16x16xbf16, #tpu.memory_space<vmem>>, vector<16x16xbf16>
    %c0_16 = arith.constant 0 : index
    %c0_17 = arith.constant 0 : index
    %43 = vector.load %arg6[%c0_16, %c0_17] : memref<128x128xbf16, #tpu.memory_space<vmem>>, vector<128x128xbf16>
    %c0_18 = arith.constant 0 : index
    %c0_19 = arith.constant 0 : index
    %44 = vector.load %arg7[%c0_18, %c0_19] : memref<128x128xbf16, #tpu.memory_space<vmem>>, vector<128x128xbf16>
    %c0_20 = arith.constant 0 : index
    %c0_21 = arith.constant 0 : index
    %45 = vector.load %arg3[%c0_20, %c0_21] : memref<16x128xf32, #tpu.memory_space<vmem>>, vector<16x128xf32>
    %46 = arith.truncf %45 : vector<16x128xf32> to vector<16x128xbf16>
    %cst_22 = arith.constant dense<0.000000e+00> : vector<16x128xf32>
    %47 = tpu.matmul %41, %46, %cst_22 {dimension_numbers = #tpu.dot_dimension_numbers<[1], [0], [0], [1], [0, 0, 1, 1], [], []>} : vector<16x16xbf16>, vector<16x128xbf16>, vector<16x128xf32> -> vector<16x128xf32>
    %48 = arith.truncf %47 : vector<16x128xf32> to vector<16x128xbf16>
    %cst_23 = arith.constant dense<0.000000e+00> : vector<16x128xf32>
    %49 = tpu.matmul %48, %44, %cst_23 {dimension_numbers = #tpu.dot_dimension_numbers<[1], [0], [0], [1], [0, 0, 1, 1], [], []>} : vector<16x128xbf16>, vector<128x128xbf16>, vector<16x128xf32> -> vector<16x128xf32>
    %50 = math.absf %49 : vector<16x128xf32>
    %51 = vector.broadcast %1 : f32 to vector<16x128xf32>
    %52 = arith.cmpf oge, %50, %51 : vector<16x128xf32>
    %53 = arith.ori %52, %40 : vector<16x128xi1>
    %cst_24 = arith.constant 0.000000e+00 : f32
    %54 = vector.broadcast %cst_24 : f32 to vector<16x128xf32>
    %55 = arith.select %53, %49, %54 : vector<16x128xi1>, vector<16x128xf32>
    %56 = arith.truncf %55 : vector<16x128xf32> to vector<16x128xbf16>
    %cst_25 = arith.constant dense<0.000000e+00> : vector<16x128xf32>
    %57 = tpu.matmul %56, %43, %cst_25 {dimension_numbers = #tpu.dot_dimension_numbers<[1], [0], [0], [1], [0, 0, 1, 1], [], []>} : vector<16x128xbf16>, vector<128x128xbf16>, vector<16x128xf32> -> vector<16x128xf32>
    %58 = arith.truncf %57 : vector<16x128xf32> to vector<16x128xbf16>
    %cst_26 = arith.constant dense<0.000000e+00> : vector<16x128xf32>
    %59 = tpu.matmul %42, %58, %cst_26 {dimension_numbers = #tpu.dot_dimension_numbers<[1], [0], [0], [1], [0, 0, 1, 1], [], []>} : vector<16x16xbf16>, vector<16x128xbf16>, vector<16x128xf32> -> vector<16x128xf32>
    %c0_27 = arith.constant 0 : index
    %c0_28 = arith.constant 0 : index
    %60 = vector.load %arg8[%c0_27, %c0_28] : memref<16x128xf32, #tpu.memory_space<vmem>>, vector<16x128xf32>
    tpu.vector_store %arg8[%c0_27, %c0_28], %59 {strides = array<i32>} : memref<16x128xf32, #tpu.memory_space<vmem>>, vector<16x128xf32>,
    return
  }
  func.func @transform_0(%arg0: i32, %arg1: i32) -> (i32, i32) {
    %c0_i32 = arith.constant 0 : i32
    %c0_i32_0 = arith.constant 0 : i32
    %c0_i32_1 = arith.constant 0 : i32
    return %c0_i32, %c0_i32_0 : i32, i32
  }
  func.func @transform_1(%arg0: i32, %arg1: i32) -> (i32, i32) {
    %c0_i32 = arith.constant 0 : i32
    return %arg0, %arg1 : i32, i32
  }
  func.func @transform_2(%arg0: i32, %arg1: i32) -> (i32, i32) {
    %c0_i32 = arith.constant 0 : i32
    %c0_i32_0 = arith.constant 0 : i32
    %c0_i32_1 = arith.constant 0 : i32
    return %c0_i32, %c0_i32_0 : i32, i32
  }
  func.func @transform_3(%arg0: i32, %arg1: i32) -> (i32, i32) {
    %c0_i32 = arith.constant 0 : i32
    %c0_i32_0 = arith.constant 0 : i32
    %c0_i32_1 = arith.constant 0 : i32
    return %c0_i32, %c0_i32_0 : i32, i32
  }
  func.func @transform_4(%arg0: i32, %arg1: i32) -> (i32, i32) {
    %c0_i32 = arith.constant 0 : i32
    %c0_i32_0 = arith.constant 0 : i32
    %c0_i32_1 = arith.constant 0 : i32
    return %c0_i32, %c0_i32_0 : i32, i32
  }
  func.func @transform_5(%arg0: i32, %arg1: i32) -> (i32, i32) {
    %c0_i32 = arith.constant 0 : i32
    %c0_i32_0 = arith.constant 0 : i32
    %c0_i32_1 = arith.constant 0 : i32
    return %c0_i32, %c0_i32_0 : i32, i32
  }
  func.func @transform_6(%arg0: i32, %arg1: i32) -> (i32, i32) {
    %c0_i32 = arith.constant 0 : i32
    return %arg0, %arg1 : i32, i32
  }
}

</mosaic_0001>

<llo_original>
// kernel: tpu_custom_call.1
$region0: #{tpu_custom_call.1}
  #allocation0 [shape = 'u32[]', space=smem, size = 0x4, offset = 0x4, fixed_abs, tag = 'smem constant byte address 0x4 - core index']
  #allocation1 [shape = 'u32[144,128]{1,0:T(1,128)}', space=vmem, size = 0x12000, scoped, tag = 'internal scratch']
  #allocation2 [shape = 'f32[1,1]{1,0:T(1,128)S(6)}', space=smem, size = 0x200, scoped, tag = 'scoped memory for tpu_custom_call.1']
  %s0 = inlined_call_operand.<no memory space> [shape: f32[1,1], index: 0, kind: input, shape index: {}]
  %s1 = inlined_call_operand.hbm [shape: f32[16,128], index: 1, kind: input, shape index: {}]
  %s2 = inlined_call_operand.hbm [shape: bf16[16,16], index: 2, kind: input, shape index: {}]
  %s3 = inlined_call_operand.hbm [shape: bf16[16,16], index: 3, kind: input, shape index: {}]
  %s4 = inlined_call_operand.hbm [shape: bf16[128,128], index: 4, kind: input, shape index: {}]
  %s5 = inlined_call_operand.hbm [shape: bf16[128,128], index: 5, kind: input, shape index: {}]
  %s6 = inlined_call_operand.hbm [shape: f32[16,128], index: 6, kind: output, shape index: {}]
  %s7 = sld [smem:[#allocation0]]
  $region54: #{tpu_custom_call.1} parent=0
    _
  %s9 = ssub.s32 1, %s7
  %s10 = scalar_select 0, %s9, %s7
  %11 = sst [smem:[#allocation2]] %s0
  $region1: #{tpu_custom_call.1} parent=0
    #allocation3 [shape = 'u8[8192]{0}', space=vmem, size = 0x2000, scoped, tag = 'input window, operand 1, single buffered']
    #allocation4 [shape = 's32[1]{0}', space=sflag, size = 0x4, scoped, tag = 'scoped memory for tpu_custom_call.1']
    #allocation5 [shape = 's32[1]{0}', space=sflag, size = 0x4, scoped, tag = 'scoped memory for tpu_custom_call.1']
    #allocation6 [shape = 'u8[4096]{0}', space=vmem, size = 0x1000, scoped, tag = 'input window, operand 2, single buffered']
    #allocation7 [shape = 's32[1]{0}', space=sflag, size = 0x4, scoped, tag = 'scoped memory for tpu_custom_call.1']
    #allocation8 [shape = 'u8[4096]{0}', space=vmem, size = 0x1000, scoped, tag = 'input window, operand 3, single buffered']
    #allocation9 [shape = 'u8[32768]{0}', space=vmem, size = 0x8000, scoped, tag = 'input window, operand 4, single buffered']
    #allocation10 [shape = 's32[1]{0}', space=sflag, size = 0x4, scoped, tag = 'scoped memory for tpu_custom_call.1']
    #allocation11 [shape = 'u8[32768]{0}', space=vmem, size = 0x8000, scoped, tag = 'input window, operand 5, single buffered']
    #allocation12 [shape = 'u8[8192]{0}', space=vmem, size = 0x2000, scoped, tag = 'output window, operand 0, single buffered']
    %12 = vsyncpa [#allocation4], 0
    %13 = vsyncpa [#allocation7], 0
    %14 = vsyncpa [#allocation10], 0
    %15 = vsyncpa [#allocation5], 0
    // Predicated region
    $region2: #{tpu_custom_call.1} parent=1 // pred_check
      _
    $region3: #{tpu_custom_call.1} parent=1 // pred_check_branch
      %17 = sbr.rel (0) target = $region5
    $region4: #{tpu_custom_call.1} parent=1 // pred_region
      _
    $region5: #{tpu_custom_call.1} parent=1 // pred_fallthru
      _
    // Predicated region
    $region6: #{tpu_custom_call.1} parent=1 // pred_check
      _
    $region7: #{tpu_custom_call.1} parent=1 // pred_check_branch
      %19 = sbr.rel (0) target = $region9
    $region8: #{tpu_custom_call.1} parent=1 // pred_region
      %s21 = ssub.s32 256, 256
      %22 = vsyncadd [#allocation4], %s21
      %s23 = sshll.u32 [#allocation3], 4
      %s24 = int_to_ptr.vmem [resolvable:$true] %s23
      %29 = dma.hbm_to_vmem [thread:$0]  %s1, 256, %s24, [#allocation4], 128, 128, 8
    $region9: #{tpu_custom_call.1} parent=1 // pred_fallthru
      _
    // Predicated region
    $region10: #{tpu_custom_call.1} parent=1 // pred_check
      _
    $region11: #{tpu_custom_call.1} parent=1 // pred_check_branch
      %31 = sbr.rel (0) target = $region13
    $region12: #{tpu_custom_call.1} parent=1 // pred_region
      %s33 = ssub.s32 128, 128
      %34 = vsyncadd [#allocation7], %s33
      %s35 = sshll.u32 [#allocation6], 4
      %s36 = int_to_ptr.vmem [resolvable:$true] %s35
      %41 = dma.hbm_to_vmem [thread:$0]  %s2, 128, %s36, [#allocation7], 64, 64, 4
    $region13: #{tpu_custom_call.1} parent=1 // pred_fallthru
      _
    // Predicated region
    $region14: #{tpu_custom_call.1} parent=1 // pred_check
      _
    $region15: #{tpu_custom_call.1} parent=1 // pred_check_branch
      %43 = sbr.rel (0) target = $region17
    $region16: #{tpu_custom_call.1} parent=1 // pred_region
      %s45 = ssub.s32 128, 128
      %46 = vsyncadd [#allocation7], %s45
      %s47 = sshll.u32 [#allocation8], 4
      %s48 = int_to_ptr.vmem [resolvable:$true] %s47
      %53 = dma.hbm_to_vmem [thread:$0]  %s3, 128, %s48, [#allocation7], 64, 64, 4
    $region17: #{tpu_custom_call.1} parent=1 // pred_fallthru
      _
    // Predicated region
    $region18: #{tpu_custom_call.1} parent=1 // pred_check
      _
    $region19: #{tpu_custom_call.1} parent=1 // pred_check_branch
      %55 = sbr.rel (0) target = $region21
    $region20: #{tpu_custom_call.1} parent=1 // pred_region
      %s57 = ssub.s32 1024, 1024
      %58 = vsyncadd [#allocation10], %s57
      %s59 = sshll.u32 [#allocation9], 4
      %s60 = int_to_ptr.vmem [resolvable:$true] %s59
      %65 = dma.hbm_to_vmem [thread:$0]  %s4, 1024, %s60, [#allocation10], 64, 64, 4
    $region21: #{tpu_custom_call.1} parent=1 // pred_fallthru
      _
    // Predicated region
    $region22: #{tpu_custom_call.1} parent=1 // pred_check
      _
    $region23: #{tpu_custom_call.1} parent=1 // pred_check_branch
      %67 = sbr.rel (0) target = $region25
    $region24: #{tpu_custom_call.1} parent=1 // pred_region
      %s69 = ssub.s32 1024, 1024
      %70 = vsyncadd [#allocation10], %s69
      %s71 = sshll.u32 [#allocation11], 4
      %s72 = int_to_ptr.vmem [resolvable:$true] %s71
      %77 = dma.hbm_to_vmem [thread:$0]  %s5, 1024, %s72, [#allocation10], 64, 64, 4
    $region25: #{tpu_custom_call.1} parent=1 // pred_fallthru
      _
    // Predicated region
    $region26: #{tpu_custom_call.1} parent=1 // pred_check
      _
    $region27: #{tpu_custom_call.1} parent=1 // pred_check_branch
      %79 = sbr.rel (0) target = $region29
    $region28: #{tpu_custom_call.1} parent=1 // pred_region
      %80 = dma.done [#allocation4], 256
    $region29: #{tpu_custom_call.1} parent=1 // pred_fallthru
      _
    // Predicated region
    $region30: #{tpu_custom_call.1} parent=1 // pred_check
      _
    $region31: #{tpu_custom_call.1} parent=1 // pred_check_branch
      %82 = sbr.rel (0) target = $region33
    $region32: #{tpu_custom_call.1} parent=1 // pred_region
      %83 = dma.done [#allocation7], 128
    $region33: #{tpu_custom_call.1} parent=1 // pred_fallthru
      _
    // Predicated region
    $region34: #{tpu_custom_call.1} parent=1 // pred_check
      _
    $region35: #{tpu_custom_call.1} parent=1 // pred_check_branch
      %85 = sbr.rel (0) target = $region37
    $region36: #{tpu_custom_call.1} parent=1 // pred_region
      %86 = dma.done [#allocation7], 128
    $region37: #{tpu_custom_call.1} parent=1 // pred_fallthru
      _
    // Predicated region
    $region38: #{tpu_custom_call.1} parent=1 // pred_check
      _
    $region39: #{tpu_custom_call.1} parent=1 // pred_check_branch
      %88 = sbr.rel (0) target = $region41
    $region40: #{tpu_custom_call.1} parent=1 // pred_region
      %89 = dma.done [#allocation10], 1024
    $region41: #{tpu_custom_call.1} parent=1 // pred_fallthru
      _
    // Predicated region
    $region42: #{tpu_custom_call.1} parent=1 // pred_check
      _
    $region43: #{tpu_custom_call.1} parent=1 // pred_check_branch
      %91 = sbr.rel (0) target = $region45
    $region44: #{tpu_custom_call.1} parent=1 // pred_region
      %92 = dma.done [#allocation10], 1024
    $region45: #{tpu_custom_call.1} parent=1 // pred_fallthru
      _
    %s94 = sld [smem:[#allocation2]]
    %s95 = smul.f32 %s94, 2.7
    %v96 = vlaneseq
    %v97 = vshrl.u32 %v96, 7
    %v98 = vadd.s32 %v97, 8
    %v99 = vlaneseq
    %v100 = vand.u32 %v99, 127
    %vm101 = vcmp.lt.s32.totalorder %v97, 0
    %v102 = vsub.s32 0, %v97
    %v103 = vsel %vm101, %v102, %v97
    %v104 = vshrl.u32 %v103, 3
    %v105 = vand.u32 %v103, 7
    %v106 = vsub.s32 0, %v105
    %v107 = vsel %vm101, %v106, %v105
    %vm108 = vcmp.lt.s32.totalorder %v98, 0
    %v109 = vsub.s32 0, %v98
    %v110 = vsel %vm108, %v109, %v98
    %v111 = vshrl.u32 %v110, 3
    %v112 = vand.u32 %v110, 7
    %v113 = vsub.s32 0, %v112
    %v114 = vsel %vm108, %v113, %v112
    %vm115 = vcmp.ne.s32.totalorder %v107, 0
    %vm116 = vcmp.ne.s32.totalorder %v114, 0
    %vm117 = vcmp.lt.s32.totalorder %v107, 0
    %vm118 = vcmp.lt.s32.totalorder %v114, 0
    %vm119 = vmand %vm117, %vm115
    %vm120 = vmand %vm118, %vm116
    %v121 = vadd.s32 %v107, 8
    %v122 = vadd.s32 %v114, 8
    %v123 = vsel %vm119, %v121, %v107
    %v124 = vsel %vm120, %v122, %v114
    %vm125 = vcmp.eq.s32.totalorder %v123, 0
    %vm126 = vcmp.eq.s32.totalorder %v124, 0
    %vm127 = vcmp.lt.s32.totalorder %v100, 0
    %v128 = vsub.s32 0, %v100
    %v129 = vsel %vm127, %v128, %v100
    %v130 = vshrl.u32 %v129, 3
    %v131 = vand.u32 %v129, 7
    %v132 = vsub.s32 0, %v131
    %v133 = vsel %vm127, %v132, %v131
    %vm134 = vcmp.ne.s32.totalorder %v133, 0
    %vm135 = vcmp.lt.s32.totalorder %v133, 0
    %vm136 = vmand %vm135, %vm134
    %v137 = vadd.s32 %v133, 8
    %v138 = vsel %vm136, %v137, %v133
    %vm139 = vcmp.eq.s32.totalorder %v138, 0
    %vm140 = vmand %vm125, %vm139
    %vm141 = vmand %vm126, %vm139
    %v142 = vld [vmem:[#allocation6] sm:$0xf]
    %v143 = vld [vmem:[#allocation6 + $0x4] sm:$0xf]
    %v144 = vld [vmem:[#allocation8] sm:$0xf]
    %v145 = vld [vmem:[#allocation8 + $0x4] sm:$0xf]
    %v146 = vld [vmem:[#allocation9] sm:$0xf]
    %v147 = vld [vmem:[#allocation9 + $0x4] sm:$0xf]
    %v148 = vld [vmem:[#allocation9 + $0x8] sm:$0xf]
    %v149 = vld [vmem:[#allocation9 + $0xc] sm:$0xf]
    %v150 = vld [vmem:[#allocation9 + $0x10] sm:$0xf]
    %v151 = vld [vmem:[#allocation9 + $0x14] sm:$0xf]
    %v152 = vld [vmem:[#allocation9 + $0x18] sm:$0xf]
    %v153 = vld [vmem:[#allocation9 + $0x1c] sm:$0xf]
    %v154 = vld [vmem:[#allocation9 + $0x20] sm:$0xf]
    %v155 = vld [vmem:[#allocation9 + $0x24] sm:$0xf]
    %v156 = vld [vmem:[#allocation9 + $0x28] sm:$0xf]
    %v157 = vld [vmem:[#allocation9 + $0x2c] sm:$0xf]
    %v158 = vld [vmem:[#allocation9 + $0x30] sm:$0xf]
    %v159 = vld [vmem:[#allocation9 + $0x34] sm:$0xf]
    %v160 = vld [vmem:[#allocation9 + $0x38] sm:$0xf]
    %v161 = vld [vmem:[#allocation9 + $0x3c] sm:$0xf]
    %v162 = vld [vmem:[#allocation11] sm:$0xf]
    %v163 = vld [vmem:[#allocation11 + $0x4] sm:$0xf]
    %v164 = vld [vmem:[#allocation11 + $0x8] sm:$0xf]
    %v165 = vld [vmem:[#allocation11 + $0xc] sm:$0xf]
    %v166 = vld [vmem:[#allocation11 + $0x10] sm:$0xf]
    %v167 = vld [vmem:[#allocation11 + $0x14] sm:$0xf]
    %v168 = vld [vmem:[#allocation11 + $0x18] sm:$0xf]
    %v169 = vld [vmem:[#allocation11 + $0x1c] sm:$0xf]
    %v170 = vld [vmem:[#allocation11 + $0x20] sm:$0xf]
    %v171 = vld [vmem:[#allocation11 + $0x24] sm:$0xf]
    %v172 = vld [vmem:[#allocation11 + $0x28] sm:$0xf]
    %v173 = vld [vmem:[#allocation11 + $0x2c] sm:$0xf]
    %v174 = vld [vmem:[#allocation11 + $0x30] sm:$0xf]
    %v175 = vld [vmem:[#allocation11 + $0x34] sm:$0xf]
    %v176 = vld [vmem:[#allocation11 + $0x38] sm:$0xf]
    %v177 = vld [vmem:[#allocation11 + $0x3c] sm:$0xf]
    %v178 = vld [vmem:[#allocation3] sm:$0xff]
    %v179 = vld [vmem:[#allocation3 + $0x8] sm:$0xff]
    %v180 = vpack.c.bf16 %v179, %v178
    %v183 = vunpack.c.l.b16 %v142
    %v184 = vunpack.c.l.b16 %v143
    %v185 = vpack.c.b16 %v184, %v183
    %vm186 = vcmask 130048
    %v188 = vsel %vm186, %v185, 0
    %190 = vmatprep.subr.bf16.mxu0 0
    %191 = vmatpush1.bf16.msra.mxu0 0
    %192 = vmatprep.subr.bf16.mxu0 0
    %193 = vmatpush1.bf16.msra.mxu0 0
    %194 = vmatprep.subr.bf16.mxu0 0
    %195 = vmatpush1.bf16.msra.mxu0 0
    %196 = vmatprep.subr.bf16.mxu0 0
    %197 = vmatpush1.bf16.msra.mxu0 0
    %198 = vmatprep.subr.bf16.mxu0 0
    %199 = vmatpush1.bf16.msra.mxu0 0
    %200 = vmatprep.subr.bf16.mxu0 0
    %201 = vmatpush1.bf16.msra.mxu0 0
    %202 = vmatprep.subr.bf16.mxu0 0
    %203 = vmatpush1.bf16.msra.mxu0 0
    %204 = vmatprep.subr.bf16.mxu0 0
    %205 = vmatpush1.bf16.msra.mxu0 %v180
    %206 = vmatprep.subr.bf16.mxu0 0
    %207 = vmatpush2.bf16.msra.mxu0 0
    %208 = vmatprep.subr.bf16.mxu0 0
    %209 = vmatpush2.bf16.msra.mxu0 0
    %210 = vmatprep.subr.bf16.mxu0 0
    %211 = vmatpush2.bf16.msra.mxu0 0
    %212 = vmatprep.subr.bf16.mxu0 0
    %213 = vmatpush2.bf16.msra.mxu0 0
    %214 = vmatprep.subr.bf16.mxu0 0
    %215 = vmatpush2.bf16.msra.mxu0 0
    %216 = vmatprep.subr.bf16.mxu0 0
    %217 = vmatpush2.bf16.msra.mxu0 0
    %218 = vmatprep.subr.bf16.mxu0 0
    %219 = vmatpush2.bf16.msra.mxu0 0
    %220 = vmatprep.subr.bf16.mxu0 0
    %221 = vmatpush2.bf16.msra.mxu0 0
    %222 = vmatprep.mubr.bf16.mxu0 0
    %223 = vmatmul.mubr.bf16.gmra.mxu0 %v188
    %v224 = vpop.f32.mrf.mxu0
    %v225 = vadd.f32 0.0, %v224
    %v226 = vpop.f32.mrf.mxu0
    %v227 = vpop.f32.mrf.mxu0
    %v228 = vadd.f32 0.0, %v227
    %v229 = vpop.f32.mrf.mxu0
    %230 = vdwg.mxu0
    %v231 = vpack.c.bf16 %v228, %v225
    %v248 = vunpack.c.l.b16 %v162
    %v249 = vunpack.c.l.b16 %v163
    %v250 = vunpack.c.l.b16 %v164
    %v251 = vunpack.c.l.b16 %v165
    %v252 = vunpack.c.l.b16 %v166
    %v253 = vunpack.c.l.b16 %v167
    %v254 = vunpack.c.l.b16 %v168
    %v255 = vunpack.c.l.b16 %v169
    %v256 = vunpack.c.l.b16 %v170
    %v257 = vunpack.c.l.b16 %v171
    %v258 = vunpack.c.l.b16 %v172
    %v259 = vunpack.c.l.b16 %v173
    %v260 = vunpack.c.l.b16 %v174
    %v261 = vunpack.c.l.b16 %v175
    %v262 = vunpack.c.l.b16 %v176
    %v263 = vunpack.c.l.b16 %v177
    %v264 = vpack.c.b16 %v249, %v248
    %v265 = vpack.c.b16 %v251, %v250
    %v266 = vpack.c.b16 %v253, %v252
    %v267 = vpack.c.b16 %v255, %v254
    %v268 = vpack.c.b16 %v257, %v256
    %v269 = vpack.c.b16 %v259, %v258
    %v270 = vpack.c.b16 %v261, %v260
    %v271 = vpack.c.b16 %v263, %v262
    %280 = vmatprep.subr.bf16.mxu0 0
    %281 = vmatpush1.bf16.msra.mxu0 %v271
    %282 = vmatprep.subr.bf16.mxu0 0
    %283 = vmatpush1.bf16.msra.mxu0 %v270
    %284 = vmatprep.subr.bf16.mxu0 0
    %285 = vmatpush1.bf16.msra.mxu0 %v269
    %286 = vmatprep.subr.bf16.mxu0 0
    %287 = vmatpush1.bf16.msra.mxu0 %v268
    %288 = vmatprep.subr.bf16.mxu0 0
    %289 = vmatpush1.bf16.msra.mxu0 %v267
    %290 = vmatprep.subr.bf16.mxu0 0
    %291 = vmatpush1.bf16.msra.mxu0 %v266
    %292 = vmatprep.subr.bf16.mxu0 0
    %293 = vmatpush1.bf16.msra.mxu0 %v265
    %294 = vmatprep.subr.bf16.mxu0 0
    %295 = vmatpush1.bf16.msra.mxu0 %v264
    %296 = vmatprep.subr.bf16.mxu0 0
    %297 = vmatpush2.bf16.msra.mxu0 0
    %298 = vmatprep.subr.bf16.mxu0 0
    %299 = vmatpush2.bf16.msra.mxu0 0
    %300 = vmatprep.subr.bf16.mxu0 0
    %301 = vmatpush2.bf16.msra.mxu0 0
    %302 = vmatprep.subr.bf16.mxu0 0
    %303 = vmatpush2.bf16.msra.mxu0 0
    %304 = vmatprep.subr.bf16.mxu0 0
    %305 = vmatpush2.bf16.msra.mxu0 0
    %306 = vmatprep.subr.bf16.mxu0 0
    %307 = vmatpush2.bf16.msra.mxu0 0
    %308 = vmatprep.subr.bf16.mxu0 0
    %309 = vmatpush2.bf16.msra.mxu0 0
    %310 = vmatprep.subr.bf16.mxu0 0
    %311 = vmatpush2.bf16.msra.mxu0 0
    %312 = vmatprep.mubr.bf16.mxu0 0
    %313 = vmatmul.mubr.bf16.gmra.mxu0 %v231
    %v314 = vpop.f32.mrf.mxu0
    %v315 = vadd.f32 0.0, %v314
    %v316 = vpop.f32.mrf.mxu0
    %v317 = vpop.f32.mrf.mxu0
    %v318 = vadd.f32 0.0, %v317
    %v319 = vpop.f32.mrf.mxu0
    %320 = vdwg.mxu0
    %v321 = vand.u32 2147483647, %v315
    %v322 = vand.u32 2147483647, %v318
    %v323 = vstv %s95
    %vm324 = vcmp.ge.f32.partialorder %v321, %v323
    %vm325 = vcmp.ge.f32.partialorder %v322, %v323
    %vm326 = vmor %vm324, %vm140
    %vm327 = vmor %vm325, %vm141
    %v328 = vsel %vm326, %v315, 0.0
    %v329 = vsel %vm327, %v318, 0.0
    %v330 = vpack.c.bf16 %v329, %v328
    %v347 = vunpack.c.l.b16 %v146
    %v348 = vunpack.c.l.b16 %v147
    %v349 = vunpack.c.l.b16 %v148
    %v350 = vunpack.c.l.b16 %v149
    %v351 = vunpack.c.l.b16 %v150
    %v352 = vunpack.c.l.b16 %v151
    %v353 = vunpack.c.l.b16 %v152
    %v354 = vunpack.c.l.b16 %v153
    %v355 = vunpack.c.l.b16 %v154
    %v356 = vunpack.c.l.b16 %v155
    %v357 = vunpack.c.l.b16 %v156
    %v358 = vunpack.c.l.b16 %v157
    %v359 = vunpack.c.l.b16 %v158
    %v360 = vunpack.c.l.b16 %v159
    %v361 = vunpack.c.l.b16 %v160
    %v362 = vunpack.c.l.b16 %v161
    %v363 = vpack.c.b16 %v348, %v347
    %v364 = vpack.c.b16 %v350, %v349
    %v365 = vpack.c.b16 %v352, %v351
    %v366 = vpack.c.b16 %v354, %v353
    %v367 = vpack.c.b16 %v356, %v355
    %v368 = vpack.c.b16 %v358, %v357
    %v369 = vpack.c.b16 %v360, %v359
    %v370 = vpack.c.b16 %v362, %v361
    %379 = vmatprep.subr.bf16.mxu0 0
    %380 = vmatpush1.bf16.msra.mxu0 %v370
    %381 = vmatprep.subr.bf16.mxu0 0
    %382 = vmatpush1.bf16.msra.mxu0 %v369
    %383 = vmatprep.subr.bf16.mxu0 0
    %384 = vmatpush1.bf16.msra.mxu0 %v368
    %385 = vmatprep.subr.bf16.mxu0 0
    %386 = vmatpush1.bf16.msra.mxu0 %v367
    %387 = vmatprep.subr.bf16.mxu0 0
    %388 = vmatpush1.bf16.msra.mxu0 %v366
    %389 = vmatprep.subr.bf16.mxu0 0
    %390 = vmatpush1.bf16.msra.mxu0 %v365
    %391 = vmatprep.subr.bf16.mxu0 0
    %392 = vmatpush1.bf16.msra.mxu0 %v364
    %393 = vmatprep.subr.bf16.mxu0 0
    %394 = vmatpush1.bf16.msra.mxu0 %v363
    %395 = vmatprep.subr.bf16.mxu0 0
    %396 = vmatpush2.bf16.msra.mxu0 0
    %397 = vmatprep.subr.bf16.mxu0 0
    %398 = vmatpush2.bf16.msra.mxu0 0
    %399 = vmatprep.subr.bf16.mxu0 0
    %400 = vmatpush2.bf16.msra.mxu0 0
    %401 = vmatprep.subr.bf16.mxu0 0
    %402 = vmatpush2.bf16.msra.mxu0 0
    %403 = vmatprep.subr.bf16.mxu0 0
    %404 = vmatpush2.bf16.msra.mxu0 0
    %405 = vmatprep.subr.bf16.mxu0 0
    %406 = vmatpush2.bf16.msra.mxu0 0
    %407 = vmatprep.subr.bf16.mxu0 0
    %408 = vmatpush2.bf16.msra.mxu0 0
    %409 = vmatprep.subr.bf16.mxu0 0
    %410 = vmatpush2.bf16.msra.mxu0 0
    %411 = vmatprep.mubr.bf16.mxu0 0
    %412 = vmatmul.mubr.bf16.gmra.mxu0 %v330
    %v413 = vpop.f32.mrf.mxu0
    %v414 = vadd.f32 0.0, %v413
    %v415 = vpop.f32.mrf.mxu0
    %v416 = vpop.f32.mrf.mxu0
    %v417 = vadd.f32 0.0, %v416
    %v418 = vpop.f32.mrf.mxu0
    %419 = vdwg.mxu0
    %v420 = vpack.c.bf16 %v417, %v414
    %v423 = vunpack.c.l.b16 %v144
    %v424 = vunpack.c.l.b16 %v145
    %v425 = vpack.c.b16 %v424, %v423
    %v427 = vsel %vm186, %v425, 0
    %429 = vmatprep.subr.bf16.mxu0 0
    %430 = vmatpush1.bf16.msra.mxu0 0
    %431 = vmatprep.subr.bf16.mxu0 0
    %432 = vmatpush1.bf16.msra.mxu0 0
    %433 = vmatprep.subr.bf16.mxu0 0
    %434 = vmatpush1.bf16.msra.mxu0 0
    %435 = vmatprep.subr.bf16.mxu0 0
    %436 = vmatpush1.bf16.msra.mxu0 0
    %437 = vmatprep.subr.bf16.mxu0 0
    %438 = vmatpush1.bf16.msra.mxu0 0
    %439 = vmatprep.subr.bf16.mxu0 0
    %440 = vmatpush1.bf16.msra.mxu0 0
    %441 = vmatprep.subr.bf16.mxu0 0
    %442 = vmatpush1.bf16.msra.mxu0 0
    %443 = vmatprep.subr.bf16.mxu0 0
    %444 = vmatpush1.bf16.msra.mxu0 %v420
    %445 = vmatprep.subr.bf16.mxu0 0
    %446 = vmatpush2.bf16.msra.mxu0 0
    %447 = vmatprep.subr.bf16.mxu0 0
    %448 = vmatpush2.bf16.msra.mxu0 0
    %449 = vmatprep.subr.bf16.mxu0 0
    %450 = vmatpush2.bf16.msra.mxu0 0
    %451 = vmatprep.subr.bf16.mxu0 0
    %452 = vmatpush2.bf16.msra.mxu0 0
    %453 = vmatprep.subr.bf16.mxu0 0
    %454 = vmatpush2.bf16.msra.mxu0 0
    %455 = vmatprep.subr.bf16.mxu0 0
    %456 = vmatpush2.bf16.msra.mxu0 0
    %457 = vmatprep.subr.bf16.mxu0 0
    %458 = vmatpush2.bf16.msra.mxu0 0
    %459 = vmatprep.subr.bf16.mxu0 0
    %460 = vmatpush2.bf16.msra.mxu0 0
    %461 = vmatprep.mubr.bf16.mxu0 0
    %462 = vmatmul.mubr.bf16.gmra.mxu0 %v427
    %v463 = vpop.f32.mrf.mxu0
    %v464 = vadd.f32 0.0, %v463
    %v465 = vpop.f32.mrf.mxu0
    %v466 = vpop.f32.mrf.mxu0
    %v467 = vadd.f32 0.0, %v466
    %v468 = vpop.f32.mrf.mxu0
    %469 = vdwg.mxu0
    %470 = vst [vmem:[#allocation12] sm:$0xff] %v464
    %471 = vst [vmem:[#allocation12 + $0x8] sm:$0xff] %v467
    // Predicated region
    $region46: #{tpu_custom_call.1} parent=1 // pred_check
      _
    $region47: #{tpu_custom_call.1} parent=1 // pred_check_branch
      %473 = sbr.rel (0) target = $region49
    $region48: #{tpu_custom_call.1} parent=1 // pred_region
      %s475 = ssub.s32 256, 256
      %476 = vsyncadd [#allocation5], %s475
      %s477 = sshll.u32 [#allocation12], 4
      %s478 = int_to_ptr.vmem [resolvable:$true] %s477
      %483 = dma.vmem_to_hbm [thread:$0]  %s478, 256, %s6, [#allocation5], 128, 128, 8
    $region49: #{tpu_custom_call.1} parent=1 // pred_fallthru
      _
    // Predicated region
    $region50: #{tpu_custom_call.1} parent=1 // pred_check
      _
    $region51: #{tpu_custom_call.1} parent=1 // pred_check_branch
      %485 = sbr.rel (0) target = $region53
    $region52: #{tpu_custom_call.1} parent=1 // pred_region
      %486 = dma.done [#allocation5], 256
    $region53: #{tpu_custom_call.1} parent=1 // pred_fallthru
      _
    %487 = vsyncpa [#allocation4], 1
    %488 = vsyncpa [#allocation7], 1
    %489 = vsyncpa [#allocation10], 1
    %490 = vsyncpa [#allocation5], 1

</llo_original>
